<compile_context>
chip_gen: v7x
topology: tpu7x:2x2x1
jax: 0.10.0
libtpu: 0.0.40
codegen_flags: <defaults>
</compile_context>

<pallas_src>
import math

import jax
import jax.numpy as jnp
from jax.experimental import pallas as pl
from jax.experimental.pallas import tpu as pltpu


_LANE = 128
_TILE_BYTES = 4 * 1024 * 1024          # per-buffer VMEM tile budget (dtype-aware edges)
_VMEM_LIMIT_BYTES = 48 * 1024 * 1024   # headroom for in+out double-buffered 4 MiB tiles


def _round_down(v, mult):
    return max(mult, (v // mult) * mult)


def _sublane_multiple(itemsize):
    # f32 -> 8, bf16 -> 16, int8/fp8 -> 32 (packed sublane granularity).
    return max(8, 32 // max(int(itemsize), 1))


def _copy_kernel(x_ref, o_ref):
    # Leading axes are squeezed / folded by the BlockSpecs; pure tile copy.
    o_ref[...] = x_ref[...]


def _swap_minor_kernel(x_ref, o_ref):
    # 2-D minor (sublane <-> lane) transpose of one tile (XLU).
    o_ref[...] = x_ref[...].T


def _simplify(shape, dims):
    """Drop size-1 axes; merge input-adjacent axes that stay adjacent & in-order
    in the output.  Returns (merged_shape, merged_dims, natural_last) where
    natural_last is the innermost original axis extent of the trailing group."""
    n = len(shape)
    keep = [a for a in range(n) if shape[a] != 1]
    if not keep:
        return (), (), 1
    red_of = {a: i for i, a in enumerate(keep)}
    red_shape = [shape[a] for a in keep]
    red_dims = [red_of[d] for d in dims if shape[d] != 1]

    groups = [[red_dims[0]]]          # runs of input-consecutive axes, in output order
    for d in red_dims[1:]:
        if d == groups[-1][-1] + 1:
            groups[-1].append(d)
        else:
            groups.append([d])

    order = sorted(range(len(groups)), key=lambda gi: groups[gi][0])   # input order
    merged_shape = tuple(int(math.prod(red_shape[a] for a in groups[gi])) for gi in order)
    merged_dims = tuple(order.index(k) for k in range(len(groups)))
    natural_last = int(red_shape[groups[-1][-1]])
    return merged_shape, merged_dims, natural_last


def _factor_slab(length, natural_last):
    """Split a preserved contiguous slab into (sublane, lane) factors, preferring
    a lane that is a multiple of 128 with >= 8 sublanes (dense, unmasked stores)."""
    for lane in (1024, 512, 256, 128):
        if length % lane == 0 and length // lane >= 8:
            return length // lane, lane
    for lane in (1024, 512, 256, 128):
        if length % lane == 0:
            return length // lane, lane
    return length // natural_last, natural_last


def _run(xv, vd, in_block, out_block, kernel):
    """Launch one pallas_call: grid walks OUTPUT blocks row-major (lane-dense
    writes), the input index_map applies the inverse permutation."""
    nv = xv.ndim
    out_shape = tuple(xv.shape[d] for d in vd)
    grid = tuple(pl.cdiv(out_shape[k], out_block[k] or 1) for k in range(nv))
    inv = tuple(vd.index(a) for a in range(nv))   # input axis -> output position

    def in_index_map(*g):
        return tuple(g[inv[a]] for a in range(nv))

    def out_index_map(*g):
        return tuple(g)

    itemsize = jnp.dtype(xv.dtype).itemsize
    return pl.pallas_call(
        kernel,
        out_shape=jax.ShapeDtypeStruct(out_shape, xv.dtype),
        grid=grid,
        in_specs=[pl.BlockSpec(tuple(in_block), in_index_map)],
        out_specs=pl.BlockSpec(tuple(out_block), out_index_map),
        compiler_params=pltpu.CompilerParams(
            dimension_semantics=("parallel",) * nv,
            vmem_limit_bytes=_VMEM_LIMIT_BYTES,
        ),
        cost_estimate=pl.CostEstimate(
            flops=0,
            transcendentals=0,
            bytes_accessed=int(2 * xv.size * itemsize),
        ),
    )(xv)


def _swap_minor(xm, md, itemsize):
    """Permutation whose two trailing merged axes swap; leading axes remapped
    purely via index_maps.  Returns None for pathological tiny-slab cases."""
    m = xm.ndim
    a_dim, b_dim = xm.shape[-2], xm.shape[-1]
    lead = math.prod(xm.shape[:-2]) if m > 2 else 1
    if a_dim * b_dim * itemsize < 4096 and lead > 256:
        return None  # many ~0-byte grid steps; XLA's transpose does better here

    elems = max(_TILE_BYTES // itemsize, 8 * _LANE)
    edge = _round_down(int(math.isqrt(elems)), _LANE)   # each tile edge becomes a
    t_a = a_dim if a_dim <= edge else edge              # lane dim on one side, so
    t_b = b_dim if b_dim <= edge else edge              # keep both 128-multiples/full
    if t_a == a_dim and t_b < b_dim:                    # re-invest leftover budget
        cap = elems // max(t_a, 1)
        t_b = b_dim if b_dim <= cap else _round_down(cap, _LANE)
    elif t_b == b_dim and t_a < a_dim:
        cap = elems // max(t_b, 1)
        t_a = a_dim if a_dim <= cap else _round_down(cap, _LANE)

    in_block = (None,) * (m - 2) + (t_a, t_b)
    out_block = (None,) * (m - 2) + (t_b, t_a)
    return _run(xm, md, in_block, out_block, _swap_minor_kernel)


def _copy_permute(xv, vd, itemsize):
    """Leading-axis permutation with the trailing (sublane, lane) slab preserved:
    pure tile copy; optionally fold one leading output axis into the block."""
    nv = xv.ndim
    shape = xv.shape
    s_dim, l_dim = shape[-2], shape[-1]
    elems = max(_TILE_BYTES // itemsize, 8 * _LANE)
    t_l = l_dim if l_dim <= elems else _round_down(elems, _LANE)
    sub = _sublane_multiple(itemsize)
    rem = max(elems // t_l, 1)
    t_s = s_dim if s_dim <= rem else _round_down(rem, sub)

    # Fold the output's innermost leading axis into the block when the minor slab
    # is small -> one big strided DMA per step instead of many tiny steps.
    fold_t = 1
    fold_axis = vd[-3]                       # input axis landing just before the slab
    if t_s == s_dim and t_l == l_dim:
        fold_t = min(int(shape[fold_axis]), max(elems // max(t_s * t_l, 1), 1))

    in_block = [fold_t if (a == fold_axis and fold_t > 1) else None
                for a in range(nv - 2)] + [t_s, t_l]
    out_block = [fold_t if (k == nv - 3 and fold_t > 1) else None
                 for k in range(nv - 2)] + [t_s, t_l]
    return _run(xv, vd, tuple(in_block), tuple(out_block), _copy_kernel)


def permute(x: jax.Array, *dims) -> jax.Array:
    """Equivalent of torch.Tensor.permute(*dims) for a jax.Array."""
    if len(dims) == 1 and isinstance(dims[0], (tuple, list)):
        dims = tuple(dims[0])
    n = x.ndim
    if len(dims) != n:
        raise ValueError(f"permute expects {n} dims, got {dims}")
    dims = tuple(int(d) % n for d in dims)
    if sorted(dims) != list(range(n)):
        raise ValueError(f"{dims} is not a permutation of {tuple(range(n))}")

    out_shape = tuple(x.shape[d] for d in dims)
    if n <= 1 or dims == tuple(range(n)):
        return x

    ms, md, natural_last = _simplify(x.shape, dims)
    m = len(ms)
    if m <= 1 or md == tuple(range(m)):
        # Only size-1 axes moved: free contiguity-preserving reshape, no kernel.
        return x.reshape(out_shape)

    itemsize = jnp.dtype(x.dtype).itemsize

    if md[-1] == m - 2 and md[-2] == m - 1:
        # Trailing merged axes swap (covers 2-D transpose, NCHW<->NHWC, ...).
        y = _swap_minor(x.reshape(ms), md, itemsize)
        if y is not None:
            return y.reshape(out_shape)
    elif md[-1] == m - 1:
        # Trailing contiguous slab preserved; only leading axes shuffle (one of
        # them becomes the output sublane).  Re-split the slab into an aligned
        # (sublane, lane) block and run the pure-copy kernel.
        a2, b2 = _factor_slab(ms[-1], natural_last)
        xv = x.reshape(ms[:-1] + (a2, b2))
        vd = md[:-1] + (m - 1, m)
        return _copy_permute(xv, vd, itemsize).reshape(out_shape)

    # TODO(synk): permutations that pull the contiguous minor (lane) slab into a
    # leading output position (e.g. dims=(0,3,2,1)) need an in-kernel major-axis
    # relayout that we do not emit yet; defer those to XLA's transpose.
    return jnp.transpose(x, dims)


class Permute:
    """Mirror of the PyTorch nn.Module: Permute(*dims)(x) == x.permute(*dims)."""

    def __init__(self, *dims):
        self.dims = dims

    def __call__(self, x):
        return permute(x, *self.dims)


if __name__ == "__main__":
    key = jax.random.PRNGKey(0)
    k1, k2, k3, k4 = jax.random.split(key, 4)

    def _check(arr, dims):
        got = Permute(*dims)(arr)
        jax.block_until_ready(got)
        want = jnp.transpose(arr, tuple(int(d) % arr.ndim for d in dims))
        assert got.shape == want.shape and got.dtype == arr.dtype, (dims, got.shape)
        assert bool(jnp.array_equal(got, want)), f"value mismatch for dims={dims}"

    # NCHW-style input: batch=2, channels=8, H=16, W=128.
    x = jax.random.normal(k1, (2, 8, 16, 128), dtype=jnp.float32)

    _check(x, (0, 1, 2, 3))   # identity                          -> no kernel
    _check(x, (1, 0, 2, 3))   # leading swap                      -> copy kernel (+ fold)
    _check(x, (0, 2, 3, 1))   # NCHW -> NHWC                      -> merged swap-minor
    _check(x, (0, 3, 1, 2))   # "NHWC" -> "NCHW"                  -> merged swap-minor
    _check(x, (1, 0, 3, 2))   # leading swap + minor transpose    -> swap-minor
    _check(x, (0, 2, 1, 3))   # (B,S,H,D) -> (B,H,S,D)            -> copy via slab split + fold
    _check(x, (0, 3, 2, 1))   # full trailing reversal            -> XLA fallback (TODO path)

    # bf16 exercises the dtype-aware tile sizing.
    xb = jax.random.normal(k2, (2, 16, 8, 128), dtype=jnp.bfloat16)
    _check(xb, (0, 2, 3, 1))

    # Plain 2-D transpose with non-(8,128)-multiple (full-block) extents.
    z = jax.random.normal(k3, (40, 136), dtype=jnp.float32)
    _check(z, (1, 0))

    # Size-1 axes are dropped/merged before dispatch.
    w = jax.random.normal(k4, (1, 12, 64), dtype=jnp.float32)
    _check(w, (2, 1, 0))

    print("KERNEL_OK")
</pallas_src>

<mosaic_0001>
module attributes {stable_mosaic.version = 11 : i64} {
  func.func @_copy_kernel(%arg0: i32, %arg1: i32, %arg2: i32, %arg3: i32, %arg4: memref<2x1x8x256xf32, #tpu.memory_space<vmem>>, %arg5: memref<1x2x8x256xf32, #tpu.memory_space<vmem>>) attributes {dimension_semantics = [#tpu.dimension_semantics<parallel>, #tpu.dimension_semantics<parallel>, #tpu.dimension_semantics<parallel>, #tpu.dimension_semantics<parallel>], iteration_bounds = array<i64: 8, 1, 1, 1>, scalar_prefetch = 0 : i64, scratch_operands = 0 : i64, tpu.core_type = #tpu.core_type<tc>, window_params = [{transform_indices = @transform_0, window_bounds = array<i64: 2, 1, 8, 256>}, {transform_indices = @transform_1, window_bounds = array<i64: 1, 2, 8, 256>}]} {
    %c0 = arith.constant 0 : index
    %c0_0 = arith.constant 0 : index
    %c0_1 = arith.constant 0 : index
    %c0_2 = arith.constant 0 : index
    %0 = vector.load %arg4[%c0, %c0_0, %c0_1, %c0_2] : memref<2x1x8x256xf32, #tpu.memory_space<vmem>>, vector<2x1x8x256xf32>
    %1 = vector.shape_cast %0 : vector<2x1x8x256xf32> to vector<2x8x256xf32>
    %c0_3 = arith.constant 0 : index
    %c0_4 = arith.constant 0 : index
    %c0_5 = arith.constant 0 : index
    %c0_6 = arith.constant 0 : index
    %2 = vector.load %arg5[%c0_3, %c0_4, %c0_5, %c0_6] : memref<1x2x8x256xf32, #tpu.memory_space<vmem>>, vector<1x2x8x256xf32>
    %3 = vector.shape_cast %2 : vector<1x2x8x256xf32> to vector<2x8x256xf32>
    %4 = vector.shape_cast %1 : vector<2x8x256xf32> to vector<1x2x8x256xf32>
    tpu.vector_store %arg5[%c0_3, %c0_4, %c0_5, %c0_6], %4 {strides = array<i32>} : memref<1x2x8x256xf32, #tpu.memory_space<vmem>>, vector<1x2x8x256xf32>,
    return
  }
  func.func @transform_0(%arg0: i32, %arg1: i32, %arg2: i32, %arg3: i32) -> (i32, i32, i32, i32) {
    %c0_i32 = arith.constant 0 : i32
    return %arg1, %arg0, %arg2, %arg3 : i32, i32, i32, i32
  }
  func.func @transform_1(%arg0: i32, %arg1: i32, %arg2: i32, %arg3: i32) -> (i32, i32, i32, i32) {
    %c0_i32 = arith.constant 0 : i32
    return %arg0, %arg1, %arg2, %arg3 : i32, i32, i32, i32
  }
}

</mosaic_0001>

<llo_original>
// kernel: tpu_custom_call.1
$region0: #{tpu_custom_call.1}
  #allocation0 [shape = 'u32[]', space=smem, size = 0x4, offset = 0x4, fixed_abs, tag = 'smem constant byte address 0x4 - core index']
  #allocation1 [shape = 'u32[144,128]{1,0:T(1,128)}', space=vmem, size = 0x12000, scoped, tag = 'internal scratch']
  %s0 = inlined_call_operand.hbm [shape: f32[2,8,8,256], index: 0, kind: input, shape index: {}]
  %s1 = inlined_call_operand.hbm [shape: f32[8,2,8,256], index: 1, kind: output, shape index: {}]
  %s2 = sld [smem:[#allocation0]]
  $region41: #{tpu_custom_call.1} parent=0
    _
  %s4 = ssub.s32 1, %s2
  %s5 = scalar_select 0, %s4, %s2
  $region1: #{tpu_custom_call.1} parent=0
    #allocation2 [shape = 'u8[32768]{0}', space=vmem, size = 0x8000, scoped, tag = 'input window, operand 0']
    #allocation3 [shape = 's32[2]{0}', space=sflag, size = 0x8, scoped, tag = 'scoped memory for tpu_custom_call.1']
    #allocation4 [shape = 's32[2]{0}', space=sflag, size = 0x8, scoped, tag = 'scoped memory for tpu_custom_call.1']
    #allocation5 [shape = 'u8[32768]{0}', space=vmem, size = 0x8000, scoped, tag = 'output window, operand 0']
    %6 = vsyncpa [#allocation3], 0
    %s7 = scalar_lea.sflag [#allocation3], 1
    %8 = vsyncpa %s7, 0
    %9 = vsyncpa [#allocation4], 0
    %s10 = scalar_lea.sflag [#allocation4], 1
    %11 = vsyncpa %s10, 0
    loop: start=0, step=1, limit=10
    $region2: #{tpu_custom_call.1} parent=1 // loop_pre_header
      _
    $region3: #{tpu_custom_call.1} parent=1 // loop_header
      %s13 = sphi 0, %s17
      %p14 = scmp.ge.s32.totalorder %s13, 10
      %s20 = sphi 0, %s46
      %s21 = sphi 0, %s42
      %s22 = sphi 0, %s38
      %s23 = sphi 0, %s34
      %s24 = sphi 0, %s20
      %s25 = sphi 0, %s21
      %s26 = sphi 0, %s22
      %s27 = sphi 0, %s23
      %s28 = sphi 0, %s24
      %s29 = sphi 0, %s25
      %s30 = sphi 0, %s26
      %s31 = sphi 0, %s27
      %s55 = sphi 0, %s57
      %s58 = sphi 0, %s55
      %s59 = sphi 0, %s58
      %s75 = sphi 0, %s59
      %s87 = sphi 0, %s89
      %s90 = sphi 0, %s87
      %s91 = sphi 0, %s90
      %s107 = sphi 0, %s91
    $region4: #{tpu_custom_call.1} parent=1 // loop_header_branch
      %16 = sbr.rel (%p14) target = $region8
    $region5: #{tpu_custom_call.1} parent=1 // loop_body
      %s18 = ssub.s32 %s13, 1
      %s19 = ssub.s32 %s13, 2
      %s32 = sadd.s32 1, %s23
      %p33 = scmp.ge.s32.totalorder %s32, 1
      %s34 = scalar_select %p33, 0, %s32
      %s35 = sadd.s32 1, %s22
      %s36 = scalar_select %p33, %s35, %s22
      %p37 = scmp.ge.s32.totalorder %s36, 1
      %s38 = scalar_select %p37, 0, %s36
      %s39 = sadd.s32 1, %s21
      %s40 = scalar_select %p37, %s39, %s21
      %p41 = scmp.ge.s32.totalorder %s40, 1
      %s42 = scalar_select %p41, 0, %s40
      %s43 = sadd.s32 1, %s20
      %s44 = scalar_select %p41, %s43, %s20
      %p45 = scmp.ge.s32.totalorder %s44, 8
      %s46 = scalar_select %p45, 0, %s44
      %s47 = ssub.s32 %s21, %s42
      %s48 = ssub.s32 %s20, %s46
      %s49 = sor.u32 %s47, %s48
      %s50 = ssub.s32 %s22, %s38
      %s51 = sor.u32 %s49, %s50
      %s52 = ssub.s32 %s23, %s34
      %s53 = sor.u32 %s51, %s52
      %p54 = scmp.eq.s32.totalorder %s53, 0
      %s56 = sadd.s32 %s55, 1
      %s57 = scalar_select %p54, %s55, %s56
      %p60 = pneg %p54
      %p61 = scmp.eq.s32.totalorder %s13, 7
      %p62 = por %p60, %p61
      %p63 = scmp.ne.s32.totalorder %s55, %s58
      %p64 = scmp.eq.s32.totalorder %s13, 0
      %p65 = por %p63, %p64
      %p66 = scmp.ne.s32.totalorder %s55, %s58
      %p67 = scmp.eq.s32.totalorder %s18, 7
      %p68 = por %p66, %p67
      %p69 = scmp.ne.s32.totalorder %s58, %s59
      %p70 = scmp.eq.s32.totalorder %s18, 0
      %p71 = por %p69, %p70
      %p72 = scmp.ne.s32.totalorder %s58, %s59
      %p73 = scmp.eq.s32.totalorder %s19, 7
      %p74 = por %p72, %p73
      %p76 = scmp.ne.s32.totalorder %s59, %s75
      %p77 = scmp.eq.s32.totalorder %s19, 0
      %p78 = por %p76, %p77
      %s79 = ssub.s32 %s20, %s46
      %s80 = ssub.s32 %s21, %s42
      %s81 = sor.u32 %s79, %s80
      %s82 = ssub.s32 %s22, %s38
      %s83 = sor.u32 %s81, %s82
      %s84 = ssub.s32 %s23, %s34
      %s85 = sor.u32 %s83, %s84
      %p86 = scmp.eq.s32.totalorder %s85, 0
      %s88 = sadd.s32 %s87, 1
      %s89 = scalar_select %p86, %s87, %s88
      %p92 = pneg %p86
      %p93 = scmp.eq.s32.totalorder %s13, 7
      %p94 = por %p92, %p93
      %p95 = scmp.ne.s32.totalorder %s87, %s90
      %p96 = scmp.eq.s32.totalorder %s13, 0
      %p97 = por %p95, %p96
      %p98 = scmp.ne.s32.totalorder %s87, %s90
      %p99 = scmp.eq.s32.totalorder %s18, 7
      %p100 = por %p98, %p99
      %p101 = scmp.ne.s32.totalorder %s90, %s91
      %p102 = scmp.eq.s32.totalorder %s18, 0
      %p103 = por %p101, %p102
      %p104 = scmp.ne.s32.totalorder %s90, %s91
      %p105 = scmp.eq.s32.totalorder %s19, 7
      %p106 = por %p104, %p105
      %p108 = scmp.ne.s32.totalorder %s91, %s107
      %p109 = scmp.eq.s32.totalorder %s19, 0
      %p110 = por %p108, %p109
      %p111 = scmp.le.s32.totalorder 1, %s13
      %p112 = scmp.lt.s32.totalorder %s13, 9
      %p113 = pnand %p111, %p112
      %p114 = pneg %p113
      // Predicated region
      $region9: #{tpu_custom_call.1} parent=5 // pred_check
        _
      $region10: #{tpu_custom_call.1} parent=5 // pred_check_branch
        %116 = sbr.rel (%p113) target = $region12
      $region11: #{tpu_custom_call.1} parent=5 // pred_region
        %s117 = ssub.s32 %s13, 1
      $region12: #{tpu_custom_call.1} parent=5 // pred_fallthru
        _
      %p118 = scmp.lt.s32.totalorder %s13, 8
      // Predicated region
      $region13: #{tpu_custom_call.1} parent=5 // pred_check
        %p119 = pneg %p118
      $region14: #{tpu_custom_call.1} parent=5 // pred_check_branch
        %121 = sbr.rel (%p119) target = $region16
      $region15: #{tpu_custom_call.1} parent=5 // pred_region
        // Predicated region
        $region17: #{tpu_custom_call.1} parent=15 // pred_check
          %p122 = pneg %p65
        $region18: #{tpu_custom_call.1} parent=15 // pred_check_branch
          %124 = sbr.rel (%p122) target = $region20
        $region19: #{tpu_custom_call.1} parent=15 // pred_region
          %s125 = sand.u32 %s55, 1
          %s126 = scalar_lea.sflag [#allocation3], %s125
          %s127 = sand.u32 %s55, 1
          %s128 = smul.addr %s127, 32
          %s129 = scalar_lea.vmem [#allocation2], %s128
          %s130 = smul.u32 2, %s21
          %s131 = smul.u32 2, %s23
          %s133 = ssub.s32 512, 512
          %134 = vsyncadd %s126, %s133
          %s135 = smul.addr %s22, 2
          %s136 = sadd.s32 %s131, %s135
          %s137 = smul.addr %s20, 2
          %s138 = sadd.s32 %s136, %s137
          %s139 = smul.addr %s130, 16
          %s140 = sadd.s32 %s138, %s139
          %s141 = smul.addr %s140, 128
          %s142 = scalar_lea.hbm %s0, %s141
          %s143 = sshll.u32 %s129, 4
          %s144 = int_to_ptr.vmem [resolvable:$true] %s143
          %149 = dma.hbm_to_vmem [thread:$0]  %s142, 512, %s144, %s126, 2048, 256, 16
        $region20: #{tpu_custom_call.1} parent=15 // pred_fallthru
          _
      $region16: #{tpu_custom_call.1} parent=5 // pred_fallthru
        _
      %p150 = scmp.le.s32.totalorder 1, %s13
      %p151 = scmp.lt.s32.totalorder %s13, 9
      %p152 = pnand %p150, %p151
      %p153 = pneg %p152
      // Predicated region
      $region21: #{tpu_custom_call.1} parent=5 // pred_check
        _
      $region22: #{tpu_custom_call.1} parent=5 // pred_check_branch
        %155 = sbr.rel (%p152) target = $region24
      $region23: #{tpu_custom_call.1} parent=5 // pred_region
        %s156 = ssub.s32 %s13, 1
        %s157 = sand.u32 %s58, 1
        %s158 = scalar_lea.sflag [#allocation3], %s157
        %s159 = sand.u32 %s58, 1
        %s160 = smul.addr %s159, 32
        %s161 = scalar_lea.vmem [#allocation2], %s160
        // Predicated region
        $region25: #{tpu_custom_call.1} parent=23 // pred_check
          %p162 = pneg %p71
        $region26: #{tpu_custom_call.1} parent=23 // pred_check_branch
          %164 = sbr.rel (%p162) target = $region28
        $region27: #{tpu_custom_call.1} parent=23 // pred_region
          %165 = dma.done %s158, 512
        $region28: #{tpu_custom_call.1} parent=23 // pred_fallthru
          _
        %s166 = sand.u32 %s58, 1
        %s167 = scalar_lea.sflag [#allocation3], %s166
        %s168 = sand.u32 %s58, 1
        %s169 = smul.addr %s168, 32
        %s170 = scalar_lea.vmem [#allocation2], %s169
        %p171 = pneg %p71
        %p172 = pneg %p68
        %p173 = pneg %p103
        %p174 = pneg %p100
        %s175 = sand.u32 %s90, 1
        %s176 = scalar_lea.sflag [#allocation4], %s175
        %s177 = sand.u32 %s90, 1
        %s178 = smul.addr %s177, 32
        %s179 = scalar_lea.vmem [#allocation5], %s178
        %s180 = smul.u32 2, %s25
        %s181 = smul.u32 2, %s27
        %s182 = smul.u32 2, %s25
        %s183 = smul.u32 2, %s27
        %v184 = vld [vmem:[%s161] sm:$0xff]
        %v185 = vld [vmem:[%s161 + $0x8] sm:$0xff]
        %v186 = vld [vmem:[%s161 + $0x10] sm:$0xff]
        %v187 = vld [vmem:[%s161 + $0x18] sm:$0xff]
        %188 = vst [vmem:[%s179] sm:$0xff] %v184
        %189 = vst [vmem:[%s179 + $0x8] sm:$0xff] %v185
        %190 = vst [vmem:[%s179 + $0x10] sm:$0xff] %v186
        %191 = vst [vmem:[%s179 + $0x18] sm:$0xff] %v187
        %s192 = sand.u32 %s90, 1
        %s193 = scalar_lea.sflag [#allocation4], %s192
        %s194 = sand.u32 %s90, 1
        %s195 = smul.addr %s194, 32
        %s196 = scalar_lea.vmem [#allocation5], %s195
        // Predicated region
        $region29: #{tpu_custom_call.1} parent=23 // pred_check
          %p197 = pneg %p100
        $region30: #{tpu_custom_call.1} parent=23 // pred_check_branch
          %199 = sbr.rel (%p197) target = $region32
        $region31: #{tpu_custom_call.1} parent=23 // pred_region
          %s200 = smul.u32 2, %s25
          %s201 = smul.u32 2, %s27
          %s203 = ssub.s32 512, 512
          %204 = vsyncadd %s193, %s203
          %s205 = smul.addr %s26, 2
          %s206 = sadd.s32 %s201, %s205
          %s207 = smul.addr %s200, 2
          %s208 = sadd.s32 %s206, %s207
          %s209 = smul.addr %s24, 4
          %s210 = sadd.s32 %s208, %s209
          %s211 = smul.addr %s210, 128
          %s212 = scalar_lea.hbm %s1, %s211
          %s213 = sshll.u32 %s196, 4
          %s214 = int_to_ptr.vmem [resolvable:$true] %s213
          %219 = dma.vmem_to_hbm [thread:$0]  %s214, 512, %s212, %s193, 256, 256, 16
        $region32: #{tpu_custom_call.1} parent=23 // pred_fallthru
          _
      $region24: #{tpu_custom_call.1} parent=5 // pred_fallthru
        _
      %p220 = scmp.le.s32.totalorder 2, %s13
      // Predicated region
      $region33: #{tpu_custom_call.1} parent=5 // pred_check
        %p221 = pneg %p220
      $region34: #{tpu_custom_call.1} parent=5 // pred_check_branch
        %223 = sbr.rel (%p221) target = $region36
      $region35: #{tpu_custom_call.1} parent=5 // pred_region
        %s224 = ssub.s32 %s13, 2
        // Predicated region
        $region37: #{tpu_custom_call.1} parent=35 // pred_check
          %p225 = pneg %p106
        $region38: #{tpu_custom_call.1} parent=35 // pred_check_branch
          %227 = sbr.rel (%p225) target = $region40
        $region39: #{tpu_custom_call.1} parent=35 // pred_region
          %s228 = sand.u32 %s91, 1
          %s229 = scalar_lea.sflag [#allocation4], %s228
          %s230 = sand.u32 %s91, 1
          %s231 = smul.addr %s230, 32
          %s232 = scalar_lea.vmem [#allocation5], %s231
          %233 = dma.done %s229, 512
        $region40: #{tpu_custom_call.1} parent=35 // pred_fallthru
          _
      $region36: #{tpu_custom_call.1} parent=5 // pred_fallthru
        _
    $region6: #{tpu_custom_call.1} parent=1 // loop_footer
      %s17 = sadd.s32 1, %s13
    $region7: #{tpu_custom_call.1} parent=1 // loop_footer_branch
      %12 = sbr.rel target = $region3
    $region8: #{tpu_custom_call.1} parent=1 // loop_exit
      _
    %234 = vsyncpa [#allocation3], 1
    %s235 = scalar_lea.sflag [#allocation3], 1
    %236 = vsyncpa %s235, 1
    %237 = vsyncpa [#allocation4], 1
    %s238 = scalar_lea.sflag [#allocation4], 1
    %239 = vsyncpa %s238, 1

</llo_original>
